<compile_context>
chip_gen: v5e
topology: v5e:2x2
jax: 0.10.0
libtpu: 0.0.40
codegen_flags: <defaults>
</compile_context>

<pallas_src>
import math
import functools

import jax
import jax.numpy as jnp
from jax import lax
from jax.experimental import pallas as pl
from jax.experimental.pallas import tpu as pltpu


def _attention_block_kernel(x_ref, wkT_ref, bk_ref, wqT_ref, bq_ref,
                            wvT_ref, bv_ref, out_ref, *, batch_tile, seq_len):
    """One grid step processes `batch_tile` batch elements.

    x_ref:   (batch_tile * T, Di)   flattened rows
    w*T_ref: (Di, Dk/Dv)            pre-transposed weights (wqT already scaled)
    b*_ref:  (1, Dk/Dv)             biases (bq already scaled)
    out_ref: (batch_tile * T, Dv)   attention read (concat happens in wrapper)
    """
    x = x_ref[...]                                            # (bt*T, Di)

    # Packed projections: one matmul per weight across all batches in the tile
    # (fills the MXU M dimension).  Weights are already transposed, so no
    # in-kernel .T.  Keep operands/accumulation in f32 (v5e has no bf16 VPU).
    keys = jnp.dot(x, wkT_ref[...], preferred_element_type=jnp.float32) + bk_ref[...]
    queries = jnp.dot(x, wqT_ref[...], preferred_element_type=jnp.float32) + bq_ref[...]
    values = jnp.dot(x, wvT_ref[...], preferred_element_type=jnp.float32) + bv_ref[...]
    # NOTE: 1/sqrt(k) is folded into wqT/bq host-side, so `queries` is already
    # scaled and the (T, T) logits never need a scaling pass.

    # Causal mask, built once and shared across the batch tile.
    T = seq_len
    row_ids = lax.broadcasted_iota(jnp.int32, (T, T), 0)
    col_ids = lax.broadcasted_iota(jnp.int32, (T, T), 1)
    causal = col_ids > row_ids                                # triu, diagonal=1
    neg_inf = jnp.float32(-jnp.inf)

    # Attention per batch element.  batch_tile is small and static, so a
    # trace-time unrolled loop over sublane-aligned (T-row) slices is fine.
    for b in range(batch_tile):
        lo = b * T
        q_b = queries[lo:lo + T, :]                           # (T, Dk)
        k_b = keys[lo:lo + T, :]                              # (T, Dk)
        v_b = values[lo:lo + T, :]                            # (T, Dv)

        # logits = Q @ K^T, contracting the key dim directly (no transpose).
        logits = lax.dot_general(q_b, k_b, (((1,), (1,)), ((), ())),
                                 preferred_element_type=jnp.float32)  # (T, T)
        logits = jnp.where(causal, neg_inf, logits)

        # Numerically-stable softmax; denominator reciprocal on the EUP.
        m = jnp.max(logits, axis=-1, keepdims=True)
        e = jnp.exp(logits - m)
        denom = jnp.sum(e, axis=-1, keepdims=True)
        probs = e * pl.reciprocal(denom, approx=True)

        # read = probs @ V
        read_b = jnp.dot(probs, v_b, preferred_element_type=jnp.float32)  # (T, Dv)
        out_ref[lo:lo + T, :] = read_b


def attention_block(x, wk, bk, wq, bq, wv, bv, *, key_dim, batch_tile=None):
    """x: (B, T, Di) float32. Weights in PyTorch nn.Linear convention
    (W: (out, in), b: (out,)). Returns (B, T, Di + Dv)."""
    B, T, Di = x.shape
    Dk = wk.shape[0]
    Dv = wv.shape[0]
    assert Dk == key_dim
    bt = B if batch_tile is None else batch_tile
    assert B % bt == 0, "batch_tile must divide B"
    inv_sqrt_k = jnp.float32(1.0 / math.sqrt(key_dim))

    # Host-side prep (one-time XLA ops, not per-grid-step work):
    #  * pre-transpose weights so the kernel does x @ W_T directly,
    #  * fold the 1/sqrt(k) softmax scale into the query projection,
    #  * keep biases 2-D for TPU-friendly broadcasting.
    wkT = wk.T                                     # (Di, Dk)
    wqT = wq.T * inv_sqrt_k                        # (Di, Dk), pre-scaled
    wvT = wv.T                                     # (Di, Dv)
    bk2 = bk.reshape(1, Dk)
    bq2 = (bq * inv_sqrt_k).reshape(1, Dk)
    bv2 = bv.reshape(1, Dv)

    # Flatten (B, T, Di) -> (B*T, Di) so projections fill the MXU M dimension.
    x2 = x.reshape(B * T, Di)
    rows = bt * T                                  # rows per grid step

    kernel = functools.partial(_attention_block_kernel,
                               batch_tile=bt, seq_len=T)

    grid_spec = pltpu.PrefetchScalarGridSpec(
        num_scalar_prefetch=0,
        grid=(B // bt,),
        in_specs=[
            pl.BlockSpec((rows, Di), lambda i: (i, 0)),   # x rows for this tile
            pl.BlockSpec((Di, Dk), lambda i: (0, 0)),     # Wk^T
            pl.BlockSpec((1, Dk), lambda i: (0, 0)),      # bk
            pl.BlockSpec((Di, Dk), lambda i: (0, 0)),     # Wq^T (pre-scaled)
            pl.BlockSpec((1, Dk), lambda i: (0, 0)),      # bq (pre-scaled)
            pl.BlockSpec((Di, Dv), lambda i: (0, 0)),     # Wv^T
            pl.BlockSpec((1, Dv), lambda i: (0, 0)),      # bv
        ],
        out_specs=pl.BlockSpec((rows, Dv), lambda i: (i, 0)),   # read only
    )

    read = pl.pallas_call(
        kernel,
        out_shape=jax.ShapeDtypeStruct((B * T, Dv), jnp.float32),
        grid_spec=grid_spec,
        compiler_params=pltpu.CompilerParams(
            dimension_semantics=("parallel",)),
    )(x2, wkT, bk2, wqT, bq2, wvT, bv2)

    # Concat with the input in the wrapper: the kernel output stays a single
    # dense slab and x is never rewritten through the kernel.
    read = read.reshape(B, T, Dv)
    return jnp.concatenate([x, read], axis=2)


def attention_block_ref(x, wk, bk, wq, bq, wv, bv, *, key_dim):
    """Pure-JAX reference, mirroring the PyTorch forward (ln=False)."""
    keys = x @ wk.T + bk
    queries = x @ wq.T + bq
    values = x @ wv.T + bv
    logits = jnp.einsum("btk,bsk->bts", queries, keys)
    T = logits.shape[1]
    mask = jnp.triu(jnp.ones((T, T), dtype=bool), k=1)
    logits = jnp.where(mask[None], -jnp.inf, logits)
    probs = jax.nn.softmax(logits / math.sqrt(key_dim), axis=2)
    read = jnp.einsum("bts,bsv->btv", probs, values)
    return jnp.concatenate([x, read], axis=2)


if __name__ == "__main__":
    # Small, module-consistent shapes: B x T x Di input.
    B, T, Di = 2, 8, 32
    Dk, Dv = 16, 16

    key = jax.random.PRNGKey(0)
    kx, kwk, kbk, kwq, kbq, kwv, kbv = jax.random.split(key, 7)

    x = jax.random.normal(kx, (B, T, Di), dtype=jnp.float32)

    # Deterministic "nn.Linear"-style init (uniform in +-1/sqrt(fan_in)).
    bound = 1.0 / math.sqrt(Di)
    wk = jax.random.uniform(kwk, (Dk, Di), jnp.float32, -bound, bound)
    bk = jax.random.uniform(kbk, (Dk,), jnp.float32, -bound, bound)
    wq = jax.random.uniform(kwq, (Dk, Di), jnp.float32, -bound, bound)
    bq = jax.random.uniform(kbq, (Dk,), jnp.float32, -bound, bound)
    wv = jax.random.uniform(kwv, (Dv, Di), jnp.float32, -bound, bound)
    bv = jax.random.uniform(kbv, (Dv,), jnp.float32, -bound, bound)

    out = attention_block(x, wk, bk, wq, bq, wv, bv, key_dim=Dk)
    out = jax.block_until_ready(out)

    ref = attention_block_ref(x, wk, bk, wq, bq, wv, bv, key_dim=Dk)
    assert out.shape == (B, T, Di + Dv), out.shape
    # Tolerance accounts for the EUP approximate reciprocal in the softmax
    # denominator (rel err ~1e-4) plus matmul reassociation from the folded
    # 1/sqrt(k) scale.
    max_err = float(jnp.max(jnp.abs(out - ref)))
    assert jnp.allclose(out, ref, atol=5e-3, rtol=5e-3), max_err

    print("KERNEL_OK")
</pallas_src>

<mosaic_0001>
module attributes {stable_mosaic.version = 11 : i64} {
  func.func @_attention_block_kernel(%arg0: i32, %arg1: memref<16x32xf32, #tpu.memory_space<vmem>>, %arg2: memref<32x16xf32, #tpu.memory_space<vmem>>, %arg3: memref<1x16xf32, #tpu.memory_space<vmem>>, %arg4: memref<32x16xf32, #tpu.memory_space<vmem>>, %arg5: memref<1x16xf32, #tpu.memory_space<vmem>>, %arg6: memref<32x16xf32, #tpu.memory_space<vmem>>, %arg7: memref<1x16xf32, #tpu.memory_space<vmem>>, %arg8: memref<16x16xf32, #tpu.memory_space<vmem>>) attributes {dimension_semantics = [#tpu.dimension_semantics<parallel>], iteration_bounds = array<i64: 1>, scalar_prefetch = 0 : i64, scratch_operands = 0 : i64, tpu.core_type = #tpu.core_type<tc>, window_params = [{transform_indices = @transform_0, window_bounds = array<i64: 16, 32>}, {pipeline_mode = #tpu.pipeline_mode<synchronous>, transform_indices = @transform_1, window_bounds = array<i64: 32, 16>}, {pipeline_mode = #tpu.pipeline_mode<synchronous>, transform_indices = @transform_2, window_bounds = array<i64: 1, 16>}, {pipeline_mode = #tpu.pipeline_mode<synchronous>, transform_indices = @transform_3, window_bounds = array<i64: 32, 16>}, {pipeline_mode = #tpu.pipeline_mode<synchronous>, transform_indices = @transform_4, window_bounds = array<i64: 1, 16>}, {pipeline_mode = #tpu.pipeline_mode<synchronous>, transform_indices = @transform_5, window_bounds = array<i64: 32, 16>}, {pipeline_mode = #tpu.pipeline_mode<synchronous>, transform_indices = @transform_6, window_bounds = array<i64: 1, 16>}, {transform_indices = @transform_7, window_bounds = array<i64: 16, 16>}]} {
    %c0 = arith.constant 0 : index
    %c0_0 = arith.constant 0 : index
    %0 = vector.load %arg1[%c0, %c0_0] : memref<16x32xf32, #tpu.memory_space<vmem>>, vector<16x32xf32>
    %c0_1 = arith.constant 0 : index
    %c0_2 = arith.constant 0 : index
    %1 = vector.load %arg2[%c0_1, %c0_2] : memref<32x16xf32, #tpu.memory_space<vmem>>, vector<32x16xf32>
    %cst = arith.constant dense<0.000000e+00> : vector<16x16xf32>
    %2 = tpu.matmul %0, %1, %cst {dimension_numbers = #tpu.dot_dimension_numbers<[1], [0], [0], [1], [0, 0, 1, 1], [], []>} : vector<16x32xf32>, vector<32x16xf32>, vector<16x16xf32> -> vector<16x16xf32>
    %c0_3 = arith.constant 0 : index
    %c0_4 = arith.constant 0 : index
    %3 = vector.load %arg3[%c0_3, %c0_4] : memref<1x16xf32, #tpu.memory_space<vmem>>, vector<1x16xf32>
    %4 = vector.broadcast %3 : vector<1x16xf32> to vector<16x16xf32>
    %5 = arith.addf %2, %4 : vector<16x16xf32>
    %c0_5 = arith.constant 0 : index
    %c0_6 = arith.constant 0 : index
    %6 = vector.load %arg4[%c0_5, %c0_6] : memref<32x16xf32, #tpu.memory_space<vmem>>, vector<32x16xf32>
    %cst_7 = arith.constant dense<0.000000e+00> : vector<16x16xf32>
    %7 = tpu.matmul %0, %6, %cst_7 {dimension_numbers = #tpu.dot_dimension_numbers<[1], [0], [0], [1], [0, 0, 1, 1], [], []>} : vector<16x32xf32>, vector<32x16xf32>, vector<16x16xf32> -> vector<16x16xf32>
    %c0_8 = arith.constant 0 : index
    %c0_9 = arith.constant 0 : index
    %8 = vector.load %arg5[%c0_8, %c0_9] : memref<1x16xf32, #tpu.memory_space<vmem>>, vector<1x16xf32>
    %9 = vector.broadcast %8 : vector<1x16xf32> to vector<16x16xf32>
    %10 = arith.addf %7, %9 : vector<16x16xf32>
    %c0_10 = arith.constant 0 : index
    %c0_11 = arith.constant 0 : index
    %11 = vector.load %arg6[%c0_10, %c0_11] : memref<32x16xf32, #tpu.memory_space<vmem>>, vector<32x16xf32>
    %cst_12 = arith.constant dense<0.000000e+00> : vector<16x16xf32>
    %12 = tpu.matmul %0, %11, %cst_12 {dimension_numbers = #tpu.dot_dimension_numbers<[1], [0], [0], [1], [0, 0, 1, 1], [], []>} : vector<16x32xf32>, vector<32x16xf32>, vector<16x16xf32> -> vector<16x16xf32>
    %c0_13 = arith.constant 0 : index
    %c0_14 = arith.constant 0 : index
    %13 = vector.load %arg7[%c0_13, %c0_14] : memref<1x16xf32, #tpu.memory_space<vmem>>, vector<1x16xf32>
    %14 = vector.broadcast %13 : vector<1x16xf32> to vector<16x16xf32>
    %15 = arith.addf %12, %14 : vector<16x16xf32>
    %16 = tpu.iota {dimensions = array<i32: 0>} : vector<8x8xi32>
    %17 = tpu.iota {dimensions = array<i32: 1>} : vector<8x8xi32>
    %18 = arith.cmpi sgt, %17, %16 : vector<8x8xi32>
    %19 = vector.extract_strided_slice %10 {offsets = [0, 0], sizes = [8, 16], strides = [1, 1]} : vector<16x16xf32> to vector<8x16xf32>
    %20 = vector.extract_strided_slice %5 {offsets = [0, 0], sizes = [8, 16], strides = [1, 1]} : vector<16x16xf32> to vector<8x16xf32>
    %21 = vector.extract_strided_slice %15 {offsets = [0, 0], sizes = [8, 16], strides = [1, 1]} : vector<16x16xf32> to vector<8x16xf32>
    %cst_15 = arith.constant dense<0.000000e+00> : vector<8x8xf32>
    %22 = tpu.matmul %19, %20, %cst_15 {dimension_numbers = #tpu.dot_dimension_numbers<[1], [1], [0], [0], [0, 0, 1, 0], [], []>} : vector<8x16xf32>, vector<8x16xf32>, vector<8x8xf32> -> vector<8x8xf32>
    %cst_16 = arith.constant 0xFF800000 : f32
    %23 = vector.broadcast %cst_16 : f32 to vector<8x8xf32>
    %24 = arith.select %18, %23, %22 : vector<8x8xi1>, vector<8x8xf32>
    %cst_17 = arith.constant dense<0xFF800000> : vector<8xf32>
    %25 = vector.multi_reduction <maximumf>, %24, %cst_17 [1] : vector<8x8xf32> to vector<8xf32>
    %26 = vector.shape_cast %25 : vector<8xf32> to vector<8x1xf32>
    %27 = vector.broadcast %26 : vector<8x1xf32> to vector<8x8xf32>
    %28 = arith.subf %24, %27 : vector<8x8xf32>
    %29 = math.exp %28 : vector<8x8xf32>
    %cst_18 = arith.constant dense<0.000000e+00> : vector<8xf32>
    %30 = vector.multi_reduction <add>, %29, %cst_18 [1] : vector<8x8xf32> to vector<8xf32>
    %31 = vector.shape_cast %30 : vector<8xf32> to vector<8x1xf32>
    %32 = tpu.reciprocal %31 {approx = true} : vector<8x1xf32> -> vector<8x1xf32>
    %33 = vector.broadcast %32 : vector<8x1xf32> to vector<8x8xf32>
    %34 = arith.mulf %29, %33 : vector<8x8xf32>
    %cst_19 = arith.constant dense<0.000000e+00> : vector<8x16xf32>
    %35 = tpu.matmul %34, %21, %cst_19 {dimension_numbers = #tpu.dot_dimension_numbers<[1], [0], [0], [1], [0, 0, 1, 1], [], []>} : vector<8x8xf32>, vector<8x16xf32>, vector<8x16xf32> -> vector<8x16xf32>
    %c0_20 = arith.constant 0 : index
    %c0_21 = arith.constant 0 : index
    %36 = vector.load %arg8[%c0_20, %c0_21] : memref<16x16xf32, #tpu.memory_space<vmem>>, vector<8x16xf32>
    tpu.vector_store %arg8[%c0_20, %c0_21], %35 {strides = array<i32>} : memref<16x16xf32, #tpu.memory_space<vmem>>, vector<8x16xf32>,
    %37 = vector.extract_strided_slice %10 {offsets = [8, 0], sizes = [8, 16], strides = [1, 1]} : vector<16x16xf32> to vector<8x16xf32>
    %38 = vector.extract_strided_slice %5 {offsets = [8, 0], sizes = [8, 16], strides = [1, 1]} : vector<16x16xf32> to vector<8x16xf32>
    %39 = vector.extract_strided_slice %15 {offsets = [8, 0], sizes = [8, 16], strides = [1, 1]} : vector<16x16xf32> to vector<8x16xf32>
    %cst_22 = arith.constant dense<0.000000e+00> : vector<8x8xf32>
    %40 = tpu.matmul %37, %38, %cst_22 {dimension_numbers = #tpu.dot_dimension_numbers<[1], [1], [0], [0], [0, 0, 1, 0], [], []>} : vector<8x16xf32>, vector<8x16xf32>, vector<8x8xf32> -> vector<8x8xf32>
    %cst_23 = arith.constant 0xFF800000 : f32
    %41 = vector.broadcast %cst_23 : f32 to vector<8x8xf32>
    %42 = arith.select %18, %41, %40 : vector<8x8xi1>, vector<8x8xf32>
    %cst_24 = arith.constant dense<0xFF800000> : vector<8xf32>
    %43 = vector.multi_reduction <maximumf>, %42, %cst_24 [1] : vector<8x8xf32> to vector<8xf32>
    %44 = vector.shape_cast %43 : vector<8xf32> to vector<8x1xf32>
    %45 = vector.broadcast %44 : vector<8x1xf32> to vector<8x8xf32>
    %46 = arith.subf %42, %45 : vector<8x8xf32>
    %47 = math.exp %46 : vector<8x8xf32>
    %cst_25 = arith.constant dense<0.000000e+00> : vector<8xf32>
    %48 = vector.multi_reduction <add>, %47, %cst_25 [1] : vector<8x8xf32> to vector<8xf32>
    %49 = vector.shape_cast %48 : vector<8xf32> to vector<8x1xf32>
    %50 = tpu.reciprocal %49 {approx = true} : vector<8x1xf32> -> vector<8x1xf32>
    %51 = vector.broadcast %50 : vector<8x1xf32> to vector<8x8xf32>
    %52 = arith.mulf %47, %51 : vector<8x8xf32>
    %cst_26 = arith.constant dense<0.000000e+00> : vector<8x16xf32>
    %53 = tpu.matmul %52, %39, %cst_26 {dimension_numbers = #tpu.dot_dimension_numbers<[1], [0], [0], [1], [0, 0, 1, 1], [], []>} : vector<8x8xf32>, vector<8x16xf32>, vector<8x16xf32> -> vector<8x16xf32>
    %c8 = arith.constant 8 : index
    %c0_27 = arith.constant 0 : index
    %54 = vector.load %arg8[%c8, %c0_27] : memref<16x16xf32, #tpu.memory_space<vmem>>, vector<8x16xf32>
    tpu.vector_store %arg8[%c8, %c0_27], %53 {strides = array<i32>} : memref<16x16xf32, #tpu.memory_space<vmem>>, vector<8x16xf32>,
    return
  }
  func.func @transform_0(%arg0: i32) -> (i32, i32) {
    %c0_i32 = arith.constant 0 : i32
    %c0_i32_0 = arith.constant 0 : i32
    return %arg0, %c0_i32 : i32, i32
  }
  func.func @transform_1(%arg0: i32) -> (i32, i32) {
    %c0_i32 = arith.constant 0 : i32
    %c0_i32_0 = arith.constant 0 : i32
    %c0_i32_1 = arith.constant 0 : i32
    return %c0_i32, %c0_i32_0 : i32, i32
  }
  func.func @transform_2(%arg0: i32) -> (i32, i32) {
    %c0_i32 = arith.constant 0 : i32
    %c0_i32_0 = arith.constant 0 : i32
    %c0_i32_1 = arith.constant 0 : i32
    return %c0_i32, %c0_i32_0 : i32, i32
  }
  func.func @transform_3(%arg0: i32) -> (i32, i32) {
    %c0_i32 = arith.constant 0 : i32
    %c0_i32_0 = arith.constant 0 : i32
    %c0_i32_1 = arith.constant 0 : i32
    return %c0_i32, %c0_i32_0 : i32, i32
  }
  func.func @transform_4(%arg0: i32) -> (i32, i32) {
    %c0_i32 = arith.constant 0 : i32
    %c0_i32_0 = arith.constant 0 : i32
    %c0_i32_1 = arith.constant 0 : i32
    return %c0_i32, %c0_i32_0 : i32, i32
  }
  func.func @transform_5(%arg0: i32) -> (i32, i32) {
    %c0_i32 = arith.constant 0 : i32
    %c0_i32_0 = arith.constant 0 : i32
    %c0_i32_1 = arith.constant 0 : i32
    return %c0_i32, %c0_i32_0 : i32, i32
  }
  func.func @transform_6(%arg0: i32) -> (i32, i32) {
    %c0_i32 = arith.constant 0 : i32
    %c0_i32_0 = arith.constant 0 : i32
    %c0_i32_1 = arith.constant 0 : i32
    return %c0_i32, %c0_i32_0 : i32, i32
  }
  func.func @transform_7(%arg0: i32) -> (i32, i32) {
    %c0_i32 = arith.constant 0 : i32
    %c0_i32_0 = arith.constant 0 : i32
    return %arg0, %c0_i32 : i32, i32
  }
}

</mosaic_0001>

<llo_original>
// kernel: tpu_custom_call.1
$region0: #{tpu_custom_call.1}
  #allocation0 [shape = 'u32[]', space=smem, size = 0x4, offset = 0x4, fixed_abs, tag = 'smem constant byte address 0x4 - core index']
  #allocation1 [shape = 'u32[72,128]{1,0:T(1,128)}', space=vmem, size = 0x9000, scoped, tag = 'internal scratch']
  %s0 = inlined_call_operand.vmem [shape: f32[16,32], index: 0, kind: input, shape index: {}]
  %s1 = inlined_call_operand.vmem [shape: f32[32,16], index: 1, kind: input, shape index: {}]
  %s2 = inlined_call_operand.vmem [shape: f32[1,16], index: 2, kind: input, shape index: {}]
  %s3 = inlined_call_operand.vmem [shape: f32[32,16], index: 3, kind: input, shape index: {}]
  %s4 = inlined_call_operand.vmem [shape: f32[1,16], index: 4, kind: input, shape index: {}]
  %s5 = inlined_call_operand.vmem [shape: f32[32,16], index: 5, kind: input, shape index: {}]
  %s6 = inlined_call_operand.vmem [shape: f32[1,16], index: 6, kind: input, shape index: {}]
  %s7 = inlined_call_operand.hbm [shape: f32[16,16], index: 7, kind: output, shape index: {}]
  %s8 = sld [smem:[#allocation0]]
  $region38: #{tpu_custom_call.1} parent=0
    _
  %s10 = ssub.s32 1, %s8
  %s11 = scalar_select 0, %s10, %s8
  $region1: #{tpu_custom_call.1} parent=0
    #allocation2 [shape = 'u8[8192]{0}', space=vmem, size = 0x2000, scoped, tag = 'output window, operand 0, single buffered']
    #allocation3 [shape = 's32[1]{0}', space=sflag, size = 0x4, scoped, tag = 'scoped memory for tpu_custom_call.1']
    %12 = vsyncpa [#allocation3], 0
    // Predicated region
    $region2: #{tpu_custom_call.1} parent=1 // pred_check
      _
    $region3: #{tpu_custom_call.1} parent=1 // pred_check_branch
      %14 = sbr.rel (0) target = $region5
    $region4: #{tpu_custom_call.1} parent=1 // pred_region
      _
    $region5: #{tpu_custom_call.1} parent=1 // pred_fallthru
      _
    // Predicated region
    $region6: #{tpu_custom_call.1} parent=1 // pred_check
      _
    $region7: #{tpu_custom_call.1} parent=1 // pred_check_branch
      %16 = sbr.rel (0) target = $region9
    $region8: #{tpu_custom_call.1} parent=1 // pred_region
      _
    $region9: #{tpu_custom_call.1} parent=1 // pred_fallthru
      _
    // Predicated region
    $region10: #{tpu_custom_call.1} parent=1 // pred_check
      _
    $region11: #{tpu_custom_call.1} parent=1 // pred_check_branch
      %18 = sbr.rel (0) target = $region13
    $region12: #{tpu_custom_call.1} parent=1 // pred_region
      _
    $region13: #{tpu_custom_call.1} parent=1 // pred_fallthru
      _
    // Predicated region
    $region14: #{tpu_custom_call.1} parent=1 // pred_check
      _
    $region15: #{tpu_custom_call.1} parent=1 // pred_check_branch
      %20 = sbr.rel (0) target = $region17
    $region16: #{tpu_custom_call.1} parent=1 // pred_region
      _
    $region17: #{tpu_custom_call.1} parent=1 // pred_fallthru
      _
    // Predicated region
    $region18: #{tpu_custom_call.1} parent=1 // pred_check
      _
    $region19: #{tpu_custom_call.1} parent=1 // pred_check_branch
      %22 = sbr.rel (0) target = $region21
    $region20: #{tpu_custom_call.1} parent=1 // pred_region
      _
    $region21: #{tpu_custom_call.1} parent=1 // pred_fallthru
      _
    // Predicated region
    $region22: #{tpu_custom_call.1} parent=1 // pred_check
      _
    $region23: #{tpu_custom_call.1} parent=1 // pred_check_branch
      %24 = sbr.rel (0) target = $region25
    $region24: #{tpu_custom_call.1} parent=1 // pred_region
      _
    $region25: #{tpu_custom_call.1} parent=1 // pred_fallthru
      _
    // Predicated region
    $region26: #{tpu_custom_call.1} parent=1 // pred_check
      _
    $region27: #{tpu_custom_call.1} parent=1 // pred_check_branch
      %26 = sbr.rel (0) target = $region29
    $region28: #{tpu_custom_call.1} parent=1 // pred_region
      _
    $region29: #{tpu_custom_call.1} parent=1 // pred_fallthru
      _
    %v27 = vld [vmem:[%s0] sm:$0xff]
    %v28 = vld [vmem:[%s0 + $0x8] sm:$0xff]
    %v29 = vld [vmem:[%s1] sm:$0xff]
    %v30 = vld [vmem:[%s1 + $0x8] sm:$0xff]
    %v31 = vld [vmem:[%s1 + $0x10] sm:$0xff]
    %v32 = vld [vmem:[%s1 + $0x18] sm:$0xff]
    %v33 = vld [vmem:[%s2] sm:$0x1]
    %v35 = vperm.slane %v33, 0
    %vm37 = vcmask 261120
    %v39 = vsel %vm37, %v27, 0
    %v42 = vsel %vm37, %v28, 0
    %44 = vmatpush.msra.mxu0 0.0
    %45 = vmatpush.msra.mxu0 0.0
    %46 = vmatpush.msra.mxu0 0.0
    %47 = vmatpush.msra.mxu0 0.0
    %48 = vmatpush.msra.mxu0 0.0
    %49 = vmatpush.msra.mxu0 0.0
    %50 = vmatpush.msra.mxu0 0.0
    %51 = vmatpush.msra.mxu0 0.0
    %52 = vmatpush.msra.mxu0 0.0
    %53 = vmatpush.msra.mxu0 0.0
    %54 = vmatpush.msra.mxu0 0.0
    %55 = vmatpush.msra.mxu0 0.0
    %56 = vmatpush.msra.mxu0 %v32
    %57 = vmatpush.msra.mxu0 %v31
    %58 = vmatpush.msra.mxu0 %v30
    %59 = vmatpush.msra.mxu0 %v29
    %60 = vmatmul.f32.gmra.mxu0 %v39
    %v61 = vpop.f32.mrf.mxu0
    %v62 = vadd.f32 %v35, %v61
    %63 = vmatmul.f32.gmra.mxu0 %v42
    %v64 = vpop.f32.mrf.mxu0
    %v65 = vadd.f32 %v35, %v64
    %66 = vdwg.mxu0
    %v67 = vld [vmem:[%s3] sm:$0xff]
    %v68 = vld [vmem:[%s3 + $0x8] sm:$0xff]
    %v69 = vld [vmem:[%s3 + $0x10] sm:$0xff]
    %v70 = vld [vmem:[%s3 + $0x18] sm:$0xff]
    %v71 = vld [vmem:[%s4] sm:$0x1]
    %v73 = vperm.slane %v71, 0
    %75 = vmatpush.msra.mxu0 0.0
    %76 = vmatpush.msra.mxu0 0.0
    %77 = vmatpush.msra.mxu0 0.0
    %78 = vmatpush.msra.mxu0 0.0
    %79 = vmatpush.msra.mxu0 0.0
    %80 = vmatpush.msra.mxu0 0.0
    %81 = vmatpush.msra.mxu0 0.0
    %82 = vmatpush.msra.mxu0 0.0
    %83 = vmatpush.msra.mxu0 0.0
    %84 = vmatpush.msra.mxu0 0.0
    %85 = vmatpush.msra.mxu0 0.0
    %86 = vmatpush.msra.mxu0 0.0
    %87 = vmatpush.msra.mxu0 %v70
    %88 = vmatpush.msra.mxu0 %v69
    %89 = vmatpush.msra.mxu0 %v68
    %90 = vmatpush.msra.mxu0 %v67
    %91 = vmatmul.f32.gmra.mxu0 %v39
    %v92 = vpop.f32.mrf.mxu0
    %v93 = vadd.f32 %v73, %v92
    %94 = vmatmul.f32.gmra.mxu0 %v42
    %v95 = vpop.f32.mrf.mxu0
    %v96 = vadd.f32 %v73, %v95
    %97 = vdwg.mxu0
    %v98 = vld [vmem:[%s5] sm:$0xff]
    %v99 = vld [vmem:[%s5 + $0x8] sm:$0xff]
    %v100 = vld [vmem:[%s5 + $0x10] sm:$0xff]
    %v101 = vld [vmem:[%s5 + $0x18] sm:$0xff]
    %v102 = vld [vmem:[%s6] sm:$0x1]
    %v104 = vperm.slane %v102, 0
    %106 = vmatpush.msra.mxu0 0.0
    %107 = vmatpush.msra.mxu0 0.0
    %108 = vmatpush.msra.mxu0 0.0
    %109 = vmatpush.msra.mxu0 0.0
    %110 = vmatpush.msra.mxu0 0.0
    %111 = vmatpush.msra.mxu0 0.0
    %112 = vmatpush.msra.mxu0 0.0
    %113 = vmatpush.msra.mxu0 0.0
    %114 = vmatpush.msra.mxu0 0.0
    %115 = vmatpush.msra.mxu0 0.0
    %116 = vmatpush.msra.mxu0 0.0
    %117 = vmatpush.msra.mxu0 0.0
    %118 = vmatpush.msra.mxu0 %v101
    %119 = vmatpush.msra.mxu0 %v100
    %120 = vmatpush.msra.mxu0 %v99
    %121 = vmatpush.msra.mxu0 %v98
    %122 = vmatmul.f32.gmra.mxu0 %v39
    %v123 = vpop.f32.mrf.mxu0
    %v124 = vadd.f32 %v104, %v123
    %125 = vmatmul.f32.gmra.mxu0 %v42
    %v126 = vpop.f32.mrf.mxu0
    %v127 = vadd.f32 %v104, %v126
    %128 = vdwg.mxu0
    %v129 = vlaneseq
    %v130 = vshrl.u32 %v129, 7
    %v131 = vlaneseq
    %v132 = vand.u32 %v131, 127
    %vm133 = vcmp.gt.s32.totalorder %v132, %v130
    %vm134 = vcmask 130048
    %v136 = vsel %vm134, %v93, 0
    %v139 = vsel %vm134, %v62, 0
    %141 = vmatpush.xpose.msra.mxu0 0.0
    %142 = vmatpush.xpose.msra.mxu0 0.0
    %143 = vmatpush.xpose.msra.mxu0 0.0
    %144 = vmatpush.xpose.msra.mxu0 0.0
    %145 = vmatpush.xpose.msra.mxu0 0.0
    %146 = vmatpush.xpose.msra.mxu0 0.0
    %147 = vmatpush.xpose.msra.mxu0 0.0
    %148 = vmatpush.xpose.msra.mxu0 0.0
    %149 = vmatpush.xpose.msra.mxu0 0.0
    %150 = vmatpush.xpose.msra.mxu0 0.0
    %151 = vmatpush.xpose.msra.mxu0 0.0
    %152 = vmatpush.xpose.msra.mxu0 0.0
    %153 = vmatpush.xpose.msra.mxu0 0.0
    %154 = vmatpush.xpose.msra.mxu0 0.0
    %155 = vmatpush.xpose.msra.mxu0 0.0
    %156 = vmatpush.xpose.msra.mxu0 %v139
    %157 = vmatmul.f32.gmra.mxu0 %v136
    %v158 = vpop.f32.mrf.mxu0
    %v159 = vadd.f32 0.0, %v158
    %160 = vdwg.mxu0
    %v161 = vsel %vm133, -inf, %v159
    %vm162 = vcmask 64512
    %v163 = vsel %vm162, %v161, -inf
    %164 = vmax.xlane.f32.xlu0 %v163
    %v165 = vpop.xlane.xlu0 %164
    %v166 = vsub.f32 %v161, %v165
    %v167 = vmul.f32 %v166, 1.442695
    %v168 = vpow.pop %v167
    %v169 = vsel %vm162, %v168, 0.0
    %170 = vadd.xlane.f32.xlu0 %v169
    %v171 = vpop.xlane.xlu0 %170
    %v172 = vrcp.pop %v171
    %v173 = vmul.f32 %v168, %v172
    %v175 = vsel %vm162, %v173, 0
    %177 = vmatpush.msra.mxu0 0.0
    %178 = vmatpush.msra.mxu0 0.0
    %179 = vmatpush.msra.mxu0 0.0
    %180 = vmatpush.msra.mxu0 0.0
    %181 = vmatpush.msra.mxu0 0.0
    %182 = vmatpush.msra.mxu0 0.0
    %183 = vmatpush.msra.mxu0 0.0
    %184 = vmatpush.msra.mxu0 0.0
    %185 = vmatpush.msra.mxu0 0.0
    %186 = vmatpush.msra.mxu0 0.0
    %187 = vmatpush.msra.mxu0 0.0
    %188 = vmatpush.msra.mxu0 0.0
    %189 = vmatpush.msra.mxu0 0.0
    %190 = vmatpush.msra.mxu0 0.0
    %191 = vmatpush.msra.mxu0 0.0
    %192 = vmatpush.msra.mxu0 %v124
    %193 = vmatmul.f32.gmra.mxu0 %v175
    %v194 = vpop.f32.mrf.mxu0
    %v195 = vadd.f32 0.0, %v194
    %196 = vdwg.mxu0
    %197 = vst.msk [vmem:[#allocation2] sm:$0xff] %vm134, %v195
    %v199 = vsel %vm134, %v96, 0
    %v202 = vsel %vm134, %v65, 0
    %204 = vmatpush.xpose.msra.mxu0 0.0
    %205 = vmatpush.xpose.msra.mxu0 0.0
    %206 = vmatpush.xpose.msra.mxu0 0.0
    %207 = vmatpush.xpose.msra.mxu0 0.0
    %208 = vmatpush.xpose.msra.mxu0 0.0
    %209 = vmatpush.xpose.msra.mxu0 0.0
    %210 = vmatpush.xpose.msra.mxu0 0.0
    %211 = vmatpush.xpose.msra.mxu0 0.0
    %212 = vmatpush.xpose.msra.mxu0 0.0
    %213 = vmatpush.xpose.msra.mxu0 0.0
    %214 = vmatpush.xpose.msra.mxu0 0.0
    %215 = vmatpush.xpose.msra.mxu0 0.0
    %216 = vmatpush.xpose.msra.mxu0 0.0
    %217 = vmatpush.xpose.msra.mxu0 0.0
    %218 = vmatpush.xpose.msra.mxu0 0.0
    %219 = vmatpush.xpose.msra.mxu0 %v202
    %220 = vmatmul.f32.gmra.mxu0 %v199
    %v221 = vpop.f32.mrf.mxu0
    %v222 = vadd.f32 0.0, %v221
    %223 = vdwg.mxu0
    %v224 = vsel %vm133, -inf, %v222
    %v225 = vsel %vm162, %v224, -inf
    %226 = vmax.xlane.f32.xlu0 %v225
    %v227 = vpop.xlane.xlu0 %226
    %v228 = vsub.f32 %v224, %v227
    %v229 = vmul.f32 %v228, 1.442695
    %v230 = vpow.pop %v229
    %v231 = vsel %vm162, %v230, 0.0
    %232 = vadd.xlane.f32.xlu0 %v231
    %v233 = vpop.xlane.xlu0 %232
    %v234 = vrcp.pop %v233
    %v235 = vmul.f32 %v230, %v234
    %v237 = vsel %vm162, %v235, 0
    %239 = vmatpush.msra.mxu0 0.0
    %240 = vmatpush.msra.mxu0 0.0
    %241 = vmatpush.msra.mxu0 0.0
    %242 = vmatpush.msra.mxu0 0.0
    %243 = vmatpush.msra.mxu0 0.0
    %244 = vmatpush.msra.mxu0 0.0
    %245 = vmatpush.msra.mxu0 0.0
    %246 = vmatpush.msra.mxu0 0.0
    %247 = vmatpush.msra.mxu0 0.0
    %248 = vmatpush.msra.mxu0 0.0
    %249 = vmatpush.msra.mxu0 0.0
    %250 = vmatpush.msra.mxu0 0.0
    %251 = vmatpush.msra.mxu0 0.0
    %252 = vmatpush.msra.mxu0 0.0
    %253 = vmatpush.msra.mxu0 0.0
    %254 = vmatpush.msra.mxu0 %v127
    %255 = vmatmul.f32.gmra.mxu0 %v237
    %v256 = vpop.f32.mrf.mxu0
    %v257 = vadd.f32 0.0, %v256
    %258 = vdwg.mxu0
    %259 = vst.msk [vmem:[#allocation2 + $0x8] sm:$0xff] %vm134, %v257
    // Predicated region
    $region30: #{tpu_custom_call.1} parent=1 // pred_check
      _
    $region31: #{tpu_custom_call.1} parent=1 // pred_check_branch
      %261 = sbr.rel (0) target = $region33
    $region32: #{tpu_custom_call.1} parent=1 // pred_region
      %263 = vsyncadd [#allocation3], 0
      %s264 = sshll.u32 [#allocation2], 4
      %s265 = int_to_ptr.vmem [resolvable:$true] %s264
      %s266 = sshll.u32 %s7, 4
      %s267 = int_to_ptr.hbm [resolvable:$true] %s266
      %272 = dma.vmem_to_hbm [thread:$0]  %s265, 256, %s267, [#allocation3], 128, 128, 8
    $region33: #{tpu_custom_call.1} parent=1 // pred_fallthru
      _
    // Predicated region
    $region34: #{tpu_custom_call.1} parent=1 // pred_check
      _
    $region35: #{tpu_custom_call.1} parent=1 // pred_check_branch
      %274 = sbr.rel (0) target = $region37
    $region36: #{tpu_custom_call.1} parent=1 // pred_region
      %276 = dma.done [#allocation3], 256
    $region37: #{tpu_custom_call.1} parent=1 // pred_fallthru
      _
    %277 = vsyncpa [#allocation3], 1

</llo_original>
